<compile_context>
chip_gen: v5e
topology: v5e:2x2
jax: 0.10.0
libtpu: 0.0.40
codegen_flags: <defaults>
</compile_context>

<pallas_src>
import jax
import jax.numpy as jnp
from jax.experimental import pallas as pl
from jax.experimental.pallas import tpu as pltpu

LN_EPS = 1e-5   # PyTorch nn.LayerNorm default
LANE = 128


def _make_kernel(e_true: int, e_pad: int):
    # Python float -> folded literal inside the traced kernel (NOT a captured jnp constant).
    inv_e = 1.0 / float(e_true)
    needs_mask = e_pad != e_true

    def kernel(x_ref, w_ref, p_ref, o_ref):
        # x_ref: (TM, K) bf16   w_ref: (K, E_pad) bf16
        # p_ref: (3, E_pad) f32 rows = [conv bias, ln gamma, ln beta]
        # o_ref: (TM, E_pad) out_dtype
        y = jnp.dot(x_ref[...], w_ref[...], preferred_element_type=jnp.float32)
        y = y + p_ref[0:1, :]                                   # conv bias (f32 broadcast)

        # Two-pass LayerNorm over the true emb_dim. Padded columns of y are exactly zero
        # (zero-padded W and bias) so the mean is unaffected; the centered values in the
        # padded columns are masked back to zero before the variance pass.
        mean = jnp.sum(y, axis=-1, keepdims=True) * inv_e
        centered = y - mean
        if needs_mask:
            col = jax.lax.broadcasted_iota(jnp.int32, centered.shape, 1)
            centered = jnp.where(col < e_true, centered, 0.0)
        var = jnp.sum(centered * centered, axis=-1, keepdims=True) * inv_e
        y_norm = centered * jax.lax.rsqrt(var + LN_EPS)
        o_ref[...] = (y_norm * p_ref[1:2, :] + p_ref[2:3, :]).astype(o_ref.dtype)

    return kernel


def _choose_tiling(M, K, E_pad, out_bytes):
    """VMEM-aware TM + vmem limit. Falls back to v7x-conservative 64 MiB off-TPU."""
    try:
        vmem = pltpu.get_tpu_info().vmem_capacity_bytes
    except Exception:
        vmem = 64 << 20                       # conservative: v7x per-TC VMEM
    budget = int(vmem * 0.6)
    # Resident (grid-constant) operands, double-buffered by default:
    resident = 2 * (K * E_pad * 2) + 2 * (8 * E_pad * 4)
    # Per-row cost: double-buffered x tile + double-buffered out tile + f32 working tile.
    per_row = 2 * (K * 2) + 2 * (E_pad * out_bytes) + E_pad * 4
    tm = max(8, (budget - resident) // max(per_row, 1))
    tm = min(tm, 2048)                        # review: 1024-2048 is the mem-bound sweet spot
    # Keep >= ~8 grid steps on large problems so v7x's 2 TCs (parallel M axis) stay busy
    # and the pipeline has room to overlap prefetch/writeback.
    if M >= 8 * 512 and pl.cdiv(M, tm) < 8:
        tm = pl.cdiv(pl.cdiv(M, 8), 8) * 8
    m8 = pl.cdiv(M, 8) * 8
    tm = min(tm, m8)
    tm = max(8, (tm // 8) * 8)
    vmem_limit = min(int(vmem * 7 // 8), 112 << 20)   # ~56 MiB on v7x, 112 MiB on v5e/v6e
    return tm, vmem_limit


def patch_embedding_conv(x, w, b, gamma, beta, *, patch_size, stride,
                         out_dtype=jnp.bfloat16):
    """x: (B, C_in, L) NCL.  w: (emb_dim, C_in, patch_size) (PyTorch Conv1d layout).
    Returns (B, L_out, emb_dim) == LayerNorm(Conv1d(x).transpose(1, 2)).
    Matmul inputs are bf16 (MXU), accumulation/LN in f32, output in `out_dtype`."""
    B, C, L = x.shape
    E = w.shape[0]
    L_out = (L - patch_size) // stride + 1
    M = B * L_out
    K = C * patch_size

    # --- patch extraction (layout only; fused into the pallas_call input when possible) ---
    if stride == patch_size:
        patches = x[:, :, : L_out * patch_size].reshape(B, C, L_out, patch_size)
        patches = patches.transpose(0, 2, 1, 3).reshape(M, K)       # c-major, tap-minor
    else:
        # TODO(synk): fold overlapping-patch extraction into the kernel (index_map over
        # L_out / manual DMA) instead of materializing the gather in HBM.
        idx = jnp.arange(L_out)[:, None] * stride + jnp.arange(patch_size)[None, :]
        patches = x[:, :, idx].transpose(0, 2, 1, 3).reshape(M, K)

    w_flat = w.reshape(E, K).T                                       # (K, E), same K ordering

    # --- lane-dense E (padded weight/param columns are zero => LN stats unchanged) ---
    E_pad = pl.cdiv(E, LANE) * LANE
    if E_pad != E:
        w_flat = jnp.pad(w_flat, ((0, 0), (0, E_pad - E)))
    params = jnp.stack([b, gamma, beta]).astype(jnp.float32)         # (3, E)
    if E_pad != E:
        params = jnp.pad(params, ((0, 0), (0, E_pad - E)))

    patches_lp = patches.astype(jnp.bfloat16)
    w_lp = w_flat.astype(jnp.bfloat16)

    out_bytes = jnp.dtype(out_dtype).itemsize
    TM, vmem_limit = _choose_tiling(M, K, E_pad, out_bytes)
    grid = (pl.cdiv(M, TM),)

    cost = pl.CostEstimate(
        flops=2 * M * K * E_pad,
        transcendentals=M,                                            # rsqrt per row
        bytes_accessed=M * K * 2 + K * E_pad * 2 + M * E_pad * out_bytes + 3 * E_pad * 4,
    )

    out = pl.pallas_call(
        _make_kernel(E, E_pad),
        out_shape=jax.ShapeDtypeStruct((M, E_pad), out_dtype),
        grid_spec=pltpu.PrefetchScalarGridSpec(
            num_scalar_prefetch=0,
            grid=grid,
            in_specs=[
                pl.BlockSpec((TM, K), lambda i: (i, 0)),              # moving x tile
                pl.BlockSpec((K, E_pad), lambda i: (0, 0)),           # resident weights
                pl.BlockSpec((3, E_pad), lambda i: (0, 0)),           # resident bias/gamma/beta
            ],
            out_specs=pl.BlockSpec((TM, E_pad), lambda i: (i, 0)),
        ),
        compiler_params=pltpu.CompilerParams(
            dimension_semantics=("parallel",),                        # independent M tiles
            vmem_limit_bytes=vmem_limit,
            allow_input_fusion=[True, False, False],                  # fuse transpose/cast into x
        ),
        cost_estimate=cost,
    )(patches_lp, w_lp, params)

    if E_pad != E:
        out = out[:, :E]
    return out.reshape(B, L_out, E)


# ---------------- references (PyTorch semantics) ----------------

def _reference_f32(x, w, b, gamma, beta, *, patch_size, stride):
    y = jax.lax.conv_general_dilated(
        x, w, window_strides=(stride,), padding="VALID",
        dimension_numbers=("NCH", "OIH", "NCH"),
        precision=jax.lax.Precision.HIGHEST)
    y = y + b[None, :, None]
    y = jnp.transpose(y, (0, 2, 1))                                   # (B, L_out, E)
    mean = jnp.mean(y, axis=-1, keepdims=True)
    var = jnp.mean((y - mean) ** 2, axis=-1, keepdims=True)
    return (y - mean) * jax.lax.rsqrt(var + LN_EPS) * gamma + beta


def _reference_bf16_inputs(x, w, b, gamma, beta, *, patch_size, stride):
    """Mirrors the kernel's bf16 quantization of the matmul inputs; f32 math, f32 output."""
    B, C, L = x.shape
    E = w.shape[0]
    L_out = (L - patch_size) // stride + 1
    idx = jnp.arange(L_out)[:, None] * stride + jnp.arange(patch_size)[None, :]
    patches = x[:, :, idx].transpose(0, 2, 1, 3).reshape(B * L_out, C * patch_size)
    patches = patches.astype(jnp.bfloat16).astype(jnp.float32)
    w_flat = w.reshape(E, -1).T.astype(jnp.bfloat16).astype(jnp.float32)
    y = jnp.dot(patches, w_flat, precision=jax.lax.Precision.HIGHEST) + b[None, :]
    mean = jnp.mean(y, axis=-1, keepdims=True)
    var = jnp.mean((y - mean) ** 2, axis=-1, keepdims=True)
    out = (y - mean) * jax.lax.rsqrt(var + LN_EPS) * gamma[None, :] + beta[None, :]
    return out.reshape(B, L_out, E)


if __name__ == "__main__":
    # Small shapes consistent with the module's forward: (B, C_in, L) -> (B, L_out, emb_dim).
    B, C_in, L = 2, 4, 16
    patch_size, stride, emb_dim = 4, 4, 32

    key = jax.random.PRNGKey(0)
    kx, kw, kb, kg, kbt = jax.random.split(key, 5)

    x = jax.random.normal(kx, (B, C_in, L), dtype=jnp.float32)
    # Deterministic synthetic parameters (not a checkpoint load).
    w = jax.random.normal(kw, (emb_dim, C_in, patch_size), dtype=jnp.float32) * 0.1
    b = jax.random.normal(kb, (emb_dim,), dtype=jnp.float32) * 0.1
    gamma = jnp.ones((emb_dim,), jnp.float32) + 0.05 * jax.random.normal(kg, (emb_dim,))
    beta = 0.05 * jax.random.normal(kbt, (emb_dim,), dtype=jnp.float32)

    out = patch_embedding_conv(x, w, b, gamma, beta,
                               patch_size=patch_size, stride=stride)
    out = jax.block_until_ready(out)

    L_out = (L - patch_size) // stride + 1
    assert out.shape == (B, L_out, emb_dim)
    assert out.dtype == jnp.bfloat16
    out_f32 = out.astype(jnp.float32)

    # Tight check: same bf16-quantized matmul inputs (verifies kernel arithmetic + LN).
    ref_q = _reference_bf16_inputs(x, w, b, gamma, beta,
                                   patch_size=patch_size, stride=stride)
    assert jnp.allclose(out_f32, ref_q, atol=3e-2, rtol=3e-2), \
        float(jnp.max(jnp.abs(out_f32 - ref_q)))

    # Fidelity check vs full-f32 PyTorch semantics (loose tol: bf16 MXU inputs + bf16 output).
    ref = _reference_f32(x, w, b, gamma, beta, patch_size=patch_size, stride=stride)
    assert jnp.allclose(out_f32, ref, atol=6e-2, rtol=6e-2), \
        float(jnp.max(jnp.abs(out_f32 - ref)))

    # Overlapping-patch path (stride < patch_size).
    out2 = patch_embedding_conv(x, w, b, gamma, beta, patch_size=4, stride=2)
    out2 = jax.block_until_ready(out2)
    ref2 = _reference_f32(x, w, b, gamma, beta, patch_size=4, stride=2)
    assert out2.shape == ref2.shape
    assert jnp.allclose(out2.astype(jnp.float32), ref2, atol=6e-2, rtol=6e-2), \
        float(jnp.max(jnp.abs(out2.astype(jnp.float32) - ref2)))

    print("KERNEL_OK")
</pallas_src>

<mosaic_0001>
module attributes {stable_mosaic.version = 11 : i64} {
  func.func @kernel(%arg0: i32, %arg1: memref<8x16xbf16, #tpu.memory_space<vmem>>, %arg2: memref<16x128xbf16, #tpu.memory_space<vmem>>, %arg3: memref<3x128xf32, #tpu.memory_space<vmem>>, %arg4: memref<8x128xbf16, #tpu.memory_space<vmem>>) attributes {dimension_semantics = [#tpu.dimension_semantics<parallel>], iteration_bounds = array<i64: 1>, scalar_prefetch = 0 : i64, scratch_operands = 0 : i64, tpu.core_type = #tpu.core_type<tc>, window_params = [{transform_indices = @transform_0, window_bounds = array<i64: 8, 16>}, {pipeline_mode = #tpu.pipeline_mode<synchronous>, transform_indices = @transform_1, window_bounds = array<i64: 16, 128>}, {pipeline_mode = #tpu.pipeline_mode<synchronous>, transform_indices = @transform_2, window_bounds = array<i64: 3, 128>}, {transform_indices = @transform_3, window_bounds = array<i64: 8, 128>}]} {
    %c0 = arith.constant 0 : index
    %c0_0 = arith.constant 0 : index
    %0 = vector.load %arg1[%c0, %c0_0] : memref<8x16xbf16, #tpu.memory_space<vmem>>, vector<8x16xbf16>
    %c0_1 = arith.constant 0 : index
    %c0_2 = arith.constant 0 : index
    %1 = vector.load %arg2[%c0_1, %c0_2] : memref<16x128xbf16, #tpu.memory_space<vmem>>, vector<16x128xbf16>
    %cst = arith.constant dense<0.000000e+00> : vector<8x128xf32>
    %2 = tpu.matmul %0, %1, %cst {dimension_numbers = #tpu.dot_dimension_numbers<[1], [0], [0], [1], [0, 0, 1, 1], [], []>} : vector<8x16xbf16>, vector<16x128xbf16>, vector<8x128xf32> -> vector<8x128xf32>
    %c0_3 = arith.constant 0 : index
    %c0_4 = arith.constant 0 : index
    %3 = vector.load %arg3[%c0_3, %c0_4] : memref<3x128xf32, #tpu.memory_space<vmem>>, vector<1x128xf32>
    %4 = vector.broadcast %3 : vector<1x128xf32> to vector<8x128xf32>
    %5 = arith.addf %2, %4 : vector<8x128xf32>
    %cst_5 = arith.constant dense<0.000000e+00> : vector<8xf32>
    %6 = vector.multi_reduction <add>, %5, %cst_5 [1] : vector<8x128xf32> to vector<8xf32>
    %7 = vector.shape_cast %6 : vector<8xf32> to vector<8x1xf32>
    %cst_6 = arith.constant 3.125000e-02 : f32
    %8 = vector.broadcast %cst_6 : f32 to vector<8x1xf32>
    %9 = arith.mulf %7, %8 : vector<8x1xf32>
    %10 = vector.broadcast %9 : vector<8x1xf32> to vector<8x128xf32>
    %11 = arith.subf %5, %10 : vector<8x128xf32>
    %12 = tpu.iota {dimensions = array<i32: 1>} : vector<8x128xi32>
    %c32_i32 = arith.constant 32 : i32
    %13 = vector.broadcast %c32_i32 : i32 to vector<8x128xi32>
    %14 = arith.cmpi slt, %12, %13 : vector<8x128xi32>
    %cst_7 = arith.constant 0.000000e+00 : f32
    %15 = vector.broadcast %cst_7 : f32 to vector<8x128xf32>
    %16 = arith.select %14, %11, %15 : vector<8x128xi1>, vector<8x128xf32>
    %17 = arith.mulf %16, %16 : vector<8x128xf32>
    %cst_8 = arith.constant dense<0.000000e+00> : vector<8xf32>
    %18 = vector.multi_reduction <add>, %17, %cst_8 [1] : vector<8x128xf32> to vector<8xf32>
    %19 = vector.shape_cast %18 : vector<8xf32> to vector<8x1xf32>
    %cst_9 = arith.constant 3.125000e-02 : f32
    %20 = vector.broadcast %cst_9 : f32 to vector<8x1xf32>
    %21 = arith.mulf %19, %20 : vector<8x1xf32>
    %cst_10 = arith.constant 9.99999974E-6 : f32
    %22 = vector.broadcast %cst_10 : f32 to vector<8x1xf32>
    %23 = arith.addf %21, %22 : vector<8x1xf32>
    %24 = math.rsqrt %23 : vector<8x1xf32>
    %25 = vector.broadcast %24 : vector<8x1xf32> to vector<8x128xf32>
    %26 = arith.mulf %16, %25 : vector<8x128xf32>
    %c1 = arith.constant 1 : index
    %c0_11 = arith.constant 0 : index
    %27 = vector.load %arg3[%c1, %c0_11] : memref<3x128xf32, #tpu.memory_space<vmem>>, vector<1x128xf32>
    %28 = vector.broadcast %27 : vector<1x128xf32> to vector<8x128xf32>
    %29 = arith.mulf %26, %28 : vector<8x128xf32>
    %c2 = arith.constant 2 : index
    %c0_12 = arith.constant 0 : index
    %30 = vector.load %arg3[%c2, %c0_12] : memref<3x128xf32, #tpu.memory_space<vmem>>, vector<1x128xf32>
    %31 = vector.broadcast %30 : vector<1x128xf32> to vector<8x128xf32>
    %32 = arith.addf %29, %31 : vector<8x128xf32>
    %33 = arith.truncf %32 : vector<8x128xf32> to vector<8x128xbf16>
    %c0_13 = arith.constant 0 : index
    %c0_14 = arith.constant 0 : index
    %34 = vector.load %arg4[%c0_13, %c0_14] : memref<8x128xbf16, #tpu.memory_space<vmem>>, vector<8x128xbf16>
    tpu.vector_store %arg4[%c0_13, %c0_14], %33 {strides = array<i32>} : memref<8x128xbf16, #tpu.memory_space<vmem>>, vector<8x128xbf16>,
    return
  }
  func.func @transform_0(%arg0: i32) -> (i32, i32) {
    %c0_i32 = arith.constant 0 : i32
    %c0_i32_0 = arith.constant 0 : i32
    return %arg0, %c0_i32 : i32, i32
  }
  func.func @transform_1(%arg0: i32) -> (i32, i32) {
    %c0_i32 = arith.constant 0 : i32
    %c0_i32_0 = arith.constant 0 : i32
    %c0_i32_1 = arith.constant 0 : i32
    return %c0_i32, %c0_i32_0 : i32, i32
  }
  func.func @transform_2(%arg0: i32) -> (i32, i32) {
    %c0_i32 = arith.constant 0 : i32
    %c0_i32_0 = arith.constant 0 : i32
    %c0_i32_1 = arith.constant 0 : i32
    return %c0_i32, %c0_i32_0 : i32, i32
  }
  func.func @transform_3(%arg0: i32) -> (i32, i32) {
    %c0_i32 = arith.constant 0 : i32
    %c0_i32_0 = arith.constant 0 : i32
    return %arg0, %c0_i32 : i32, i32
  }
}

</mosaic_0001>

<llo_original>
// kernel: tpu_custom_call.1
$region0: #{tpu_custom_call.1}
  #allocation0 [shape = 'u32[]', space=smem, size = 0x4, offset = 0x4, fixed_abs, tag = 'smem constant byte address 0x4 - core index']
  #allocation1 [shape = 'u32[72,128]{1,0:T(1,128)}', space=vmem, size = 0x9000, scoped, tag = 'internal scratch']
  %s0 = inlined_call_operand.hbm [shape: bf16[8,16], index: 0, kind: input, shape index: {}]
  %s1 = inlined_call_operand.hbm [shape: bf16[16,128], index: 1, kind: input, shape index: {}]
  %s2 = inlined_call_operand.hbm [shape: f32[3,128], index: 2, kind: input, shape index: {}]
  %s3 = inlined_call_operand.hbm [shape: bf16[8,128], index: 3, kind: output, shape index: {}]
  %s4 = sld [smem:[#allocation0]]
  $region34: #{tpu_custom_call.1} parent=0
    _
  %s6 = ssub.s32 1, %s4
  %s7 = scalar_select 0, %s6, %s4
  $region1: #{tpu_custom_call.1} parent=0
    #allocation2 [shape = 'u8[2048]{0}', space=vmem, size = 0x800, scoped, tag = 'input window, operand 0, single buffered']
    #allocation3 [shape = 's32[1]{0}', space=sflag, size = 0x4, scoped, tag = 'scoped memory for tpu_custom_call.1']
    #allocation4 [shape = 's32[1]{0}', space=sflag, size = 0x4, scoped, tag = 'scoped memory for tpu_custom_call.1']
    #allocation5 [shape = 'u8[4096]{0}', space=vmem, size = 0x1000, scoped, tag = 'input window, operand 1, single buffered']
    #allocation6 [shape = 's32[1]{0}', space=sflag, size = 0x4, scoped, tag = 'scoped memory for tpu_custom_call.1']
    #allocation7 [shape = 'u8[2048]{0}', space=vmem, size = 0x800, scoped, tag = 'input window, operand 2, single buffered']
    #allocation8 [shape = 'u8[2048]{0}', space=vmem, size = 0x800, scoped, tag = 'output window, operand 0, single buffered']
    %8 = vsyncpa [#allocation3], 0
    %9 = vsyncpa [#allocation6], 0
    %10 = vsyncpa [#allocation4], 0
    // Predicated region
    $region2: #{tpu_custom_call.1} parent=1 // pred_check
      _
    $region3: #{tpu_custom_call.1} parent=1 // pred_check_branch
      %12 = sbr.rel (0) target = $region5
    $region4: #{tpu_custom_call.1} parent=1 // pred_region
      %14 = vsyncadd [#allocation3], 0
      %s16 = sshll.u32 %s0, 4
      %s17 = int_to_ptr.hbm [resolvable:$true] %s16
      %s18 = sshll.u32 [#allocation2], 4
      %s19 = int_to_ptr.vmem [resolvable:$true] %s18
      %21 = dma.hbm_to_vmem [thread:$0]  %s17, 64, %s19, [#allocation3]
    $region5: #{tpu_custom_call.1} parent=1 // pred_fallthru
      _
    // Predicated region
    $region6: #{tpu_custom_call.1} parent=1 // pred_check
      _
    $region7: #{tpu_custom_call.1} parent=1 // pred_check_branch
      %23 = sbr.rel (0) target = $region9
    $region8: #{tpu_custom_call.1} parent=1 // pred_region
      %25 = vsyncadd [#allocation6], 0
      %s26 = sshll.u32 %s1, 4
      %s27 = int_to_ptr.hbm [resolvable:$true] %s26
      %s28 = sshll.u32 [#allocation5], 4
      %s29 = int_to_ptr.vmem [resolvable:$true] %s28
      %34 = dma.hbm_to_vmem [thread:$0]  %s27, 128, %s29, [#allocation6], 64, 64, 4
    $region9: #{tpu_custom_call.1} parent=1 // pred_fallthru
      _
    // Predicated region
    $region10: #{tpu_custom_call.1} parent=1 // pred_check
      _
    $region11: #{tpu_custom_call.1} parent=1 // pred_check_branch
      %36 = sbr.rel (0) target = $region13
    $region12: #{tpu_custom_call.1} parent=1 // pred_region
      %38 = vsyncadd [#allocation6], 0
      %s40 = sshll.u32 %s2, 4
      %s41 = int_to_ptr.hbm [resolvable:$true] %s40
      %s42 = sshll.u32 [#allocation7], 4
      %s43 = int_to_ptr.vmem [resolvable:$true] %s42
      %45 = dma.hbm_to_vmem [thread:$0]  %s41, 64, %s43, [#allocation6]
    $region13: #{tpu_custom_call.1} parent=1 // pred_fallthru
      _
    // Predicated region
    $region14: #{tpu_custom_call.1} parent=1 // pred_check
      _
    $region15: #{tpu_custom_call.1} parent=1 // pred_check_branch
      %47 = sbr.rel (0) target = $region17
    $region16: #{tpu_custom_call.1} parent=1 // pred_region
      %49 = dma.done [#allocation3], 64
    $region17: #{tpu_custom_call.1} parent=1 // pred_fallthru
      _
    // Predicated region
    $region18: #{tpu_custom_call.1} parent=1 // pred_check
      _
    $region19: #{tpu_custom_call.1} parent=1 // pred_check_branch
      %51 = sbr.rel (0) target = $region21
    $region20: #{tpu_custom_call.1} parent=1 // pred_region
      %53 = dma.done [#allocation6], 128
    $region21: #{tpu_custom_call.1} parent=1 // pred_fallthru
      _
    // Predicated region
    $region22: #{tpu_custom_call.1} parent=1 // pred_check
      _
    $region23: #{tpu_custom_call.1} parent=1 // pred_check_branch
      %55 = sbr.rel (0) target = $region25
    $region24: #{tpu_custom_call.1} parent=1 // pred_region
      %57 = dma.done [#allocation6], 64
    $region25: #{tpu_custom_call.1} parent=1 // pred_fallthru
      _
    %v59 = vld [vmem:[#allocation2] sm:$0xf]
    %v60 = vld [vmem:[#allocation5] sm:$0xf]
    %v61 = vld [vmem:[#allocation5 + $0x4] sm:$0xf]
    %v62 = vld [vmem:[#allocation7] sm:$0x1]
    %v63 = vperm.slane %v62, 0
    %v66 = vunpack.c.l.b16 %v60
    %v67 = vunpack.c.l.b16 %v61
    %v68 = vpack.c.b16 %v67, %v66
    %vm70 = vcmask 130048
    %v72 = vsel %vm70, %v59, 0
    %74 = vmatpush.bf16.msra.mxu0 0
    %75 = vmatpush.bf16.msra.mxu0 0
    %76 = vmatpush.bf16.msra.mxu0 0
    %77 = vmatpush.bf16.msra.mxu0 0
    %78 = vmatpush.bf16.msra.mxu0 0
    %79 = vmatpush.bf16.msra.mxu0 0
    %80 = vmatpush.bf16.msra.mxu0 0
    %81 = vmatpush.bf16.msra.mxu0 %v68
    %82 = vmatmul.bf16.gmra.mxu0 %v72
    %v83 = vpop.f32.mrf.mxu0
    %v84 = vadd.f32 %v63, %v83
    %v85 = vpop.f32.mrf.mxu0
    %86 = vdwg.mxu0
    %87 = vadd.xlane.f32.xlu0 %v84
    %v88 = vpop.xlane.xlu0 %87
    %v89 = vmul.f32 %v88, 0.03125
    %v90 = vsub.f32 %v84, %v89
    %v91 = vlaneseq
    %v92 = vand.u32 %v91, 127
    %vm93 = vcmp.lt.s32.totalorder %v92, 32
    %v94 = vsel %vm93, %v90, 0.0
    %v95 = vmul.f32 %v94, %v94
    %96 = vadd.xlane.f32.xlu0 %v95
    %v97 = vpop.xlane.xlu0 %96
    %v98 = vmul.f32 %v97, 0.03125
    %v99 = vadd.f32 %v98, 1e-05
    %v100 = vrsqrt.pop %v99
    %v101 = vmul.f32 %v100, %v99
    %v102 = vmul.f32 %v101, %v100
    %v103 = vmul.f32 0.5, %v102
    %v104 = vsub.f32 1.5, %v103
    %v105 = vmul.f32 %v100, %v104
    %vm106 = vweird.f32 %v99
    %vm107 = vweird.f32 %v100
    %vm108 = vmor %vm106, %vm107
    %v109 = vsel %vm108, %v100, %v105
    %v110 = vmul.f32 %v94, %v109
    %v111 = vld [vmem:[#allocation7 + $0x1] sm:$0x1]
    %v112 = vperm.slane %v111, 0
    %v113 = vmul.f32 %v110, %v112
    %v114 = vld [vmem:[#allocation7 + $0x2] sm:$0x1]
    %v115 = vperm.slane %v114, 0
    %v116 = vadd.f32 %v113, %v115
    %v117 = vpack.c.bf16 %v116, %v116
    %118 = vst [vmem:[#allocation8] sm:$0xf] %v117
    // Predicated region
    $region26: #{tpu_custom_call.1} parent=1 // pred_check
      _
    $region27: #{tpu_custom_call.1} parent=1 // pred_check_branch
      %120 = sbr.rel (0) target = $region29
    $region28: #{tpu_custom_call.1} parent=1 // pred_region
      %122 = vsyncadd [#allocation4], 0
      %s124 = sshll.u32 [#allocation8], 4
      %s125 = int_to_ptr.vmem [resolvable:$true] %s124
      %s126 = sshll.u32 %s3, 4
      %s127 = int_to_ptr.hbm [resolvable:$true] %s126
      %129 = dma.vmem_to_hbm [thread:$0]  %s125, 64, %s127, [#allocation4]
    $region29: #{tpu_custom_call.1} parent=1 // pred_fallthru
      _
    // Predicated region
    $region30: #{tpu_custom_call.1} parent=1 // pred_check
      _
    $region31: #{tpu_custom_call.1} parent=1 // pred_check_branch
      %131 = sbr.rel (0) target = $region33
    $region32: #{tpu_custom_call.1} parent=1 // pred_region
      %133 = dma.done [#allocation4], 64
    $region33: #{tpu_custom_call.1} parent=1 // pred_fallthru
      _
    %134 = vsyncpa [#allocation3], 1
    %135 = vsyncpa [#allocation6], 1
    %136 = vsyncpa [#allocation4], 1

</llo_original>
